<compile_context>
chip_gen: v7x
topology: tpu7x:2x2x1
jax: 0.10.0
libtpu: 0.0.40
codegen_flags: <defaults>
</compile_context>

<pallas_src>
from functools import partial
from typing import NamedTuple

import numpy as np
import jax
import jax.numpy as jnp
from jax.experimental import pallas as pl
from jax.experimental.pallas import tpu as pltpu


# ---------------------------------------------------------------------------
# Kernel 1: PatchEmbed1D  (Conv1d k=P stride=P  ->  (B, L//P, E))
# ---------------------------------------------------------------------------
def _patch_embed_kernel(x_ref, w_ref, b_ref, o_ref):
    # x_ref: (1, C, TILE_NP, P)   w_ref: (C, P, E_pad)   b_ref: (1, E_pad)
    # o_ref: (1, TILE_NP, E_pad)
    c_dim = x_ref.shape[1]
    acc = jnp.dot(x_ref[0, 0], w_ref[0], preferred_element_type=jnp.float32)
    for c in range(1, c_dim):          # static unroll; in_chans is tiny
        acc += jnp.dot(x_ref[0, c], w_ref[c], preferred_element_type=jnp.float32)
    acc += b_ref[...].astype(jnp.float32)
    o_ref[0] = acc.astype(o_ref.dtype)


def _pick_tile_np(num_patches, e_pad, itemsize=4, budget_bytes=8 * 1024 * 1024):
    """Patch-tile rows: multiple of 8 (or full dim), divides num_patches,
    keeps double-buffered output blocks within ~budget_bytes."""
    if num_patches <= 8:
        return num_patches
    cap = max(8, budget_bytes // (2 * e_pad * itemsize * 2))
    cap = min(cap, num_patches)
    t = cap - (cap % 8)
    while t >= 8:
        if num_patches % t == 0:
            return t
        t -= 8
    return num_patches


@partial(jax.jit, static_argnames=("patch_size",))
def patch_embed_1d(x, weight, bias, patch_size):
    """x: (B, C, L) NCL; weight: (E, C, P); bias: (E,).  Returns (B, L//P, E)."""
    B, C, L = x.shape
    E, Cw, P = weight.shape
    assert Cw == C and P == patch_size and L % P == 0, "shape mismatch"
    num_patches = L // P

    x4 = x.reshape(B, C, num_patches, P)                 # copy-free view, no transpose
    e_pad = ((E + 127) // 128) * 128                      # lane-dense output
    w = jnp.pad(jnp.transpose(weight, (1, 2, 0)), ((0, 0), (0, 0), (0, e_pad - E)))
    b = jnp.pad(bias, (0, e_pad - E)).reshape(1, e_pad)

    tile_np = _pick_tile_np(num_patches, e_pad, itemsize=x.dtype.itemsize)
    grid = (B, num_patches // tile_np)

    flops = 2 * B * num_patches * C * P * e_pad
    bytes_accessed = (x4.size * x4.dtype.itemsize + w.size * w.dtype.itemsize
                      + b.size * b.dtype.itemsize
                      + B * num_patches * e_pad * x.dtype.itemsize)

    out = pl.pallas_call(
        _patch_embed_kernel,
        out_shape=jax.ShapeDtypeStruct((B, num_patches, e_pad), x.dtype),
        grid=grid,
        in_specs=[
            pl.BlockSpec((1, C, tile_np, P), lambda bi, pi: (bi, 0, pi, 0)),
            pl.BlockSpec((C, P, e_pad), lambda bi, pi: (0, 0, 0)),
            pl.BlockSpec((1, e_pad), lambda bi, pi: (0, 0)),
        ],
        out_specs=pl.BlockSpec((1, tile_np, e_pad), lambda bi, pi: (bi, pi, 0)),
        compiler_params=pltpu.CompilerParams(
            dimension_semantics=("parallel", "parallel"),
            vmem_limit_bytes=32 * 1024 * 1024),
        cost_estimate=pl.CostEstimate(flops=flops, transcendentals=0,
                                      bytes_accessed=bytes_accessed),
    )(x4, w, b)
    return out[..., :E] if e_pad != E else out


# ---------------------------------------------------------------------------
# Kernel 2: fused Linear (+ bias + optional GELU)
# ---------------------------------------------------------------------------
def _row_tile(m, max_tile=512):
    if m <= max_tile:
        return m
    t = max_tile - (max_tile % 8)
    while t >= 8:
        if m % t == 0:
            return t
        t -= 8
    return m


def _linear_kernel(x_ref, w_ref, b_ref, o_ref, *, activation):
    acc = jnp.dot(x_ref[...], w_ref[...], preferred_element_type=jnp.float32)
    acc = acc + b_ref[...].astype(jnp.float32)
    if activation == "gelu":
        acc = jax.nn.gelu(acc, approximate=True)
    o_ref[...] = acc.astype(o_ref.dtype)


def linear(x, w, b, activation="none"):
    """x: (..., K), w: (K, N), b: (N,) -> (..., N)."""
    *lead, K = x.shape
    N = w.shape[1]
    M = int(np.prod(lead)) if lead else 1
    x2 = x.reshape(M, K)
    tile_m = _row_tile(M)
    out = pl.pallas_call(
        partial(_linear_kernel, activation=activation),
        out_shape=jax.ShapeDtypeStruct((M, N), x.dtype),
        grid=(M // tile_m,),
        in_specs=[
            pl.BlockSpec((tile_m, K), lambda i: (i, 0)),
            pl.BlockSpec((K, N), lambda i: (0, 0)),
            pl.BlockSpec((1, N), lambda i: (0, 0)),
        ],
        out_specs=pl.BlockSpec((tile_m, N), lambda i: (i, 0)),
        compiler_params=pltpu.CompilerParams(dimension_semantics=("parallel",)),
    )(x2, w, b.reshape(1, N))
    return out.reshape(*lead, N)


# ---------------------------------------------------------------------------
# Kernel 3: LayerNorm over the last dim
# ---------------------------------------------------------------------------
def _layernorm_kernel(x_ref, g_ref, b_ref, o_ref, *, eps):
    x = x_ref[...].astype(jnp.float32)
    mu = jnp.mean(x, axis=-1, keepdims=True)
    var = jnp.mean(jnp.square(x - mu), axis=-1, keepdims=True)
    y = (x - mu) * jax.lax.rsqrt(var + eps)
    y = y * g_ref[...].astype(jnp.float32) + b_ref[...].astype(jnp.float32)
    o_ref[...] = y.astype(o_ref.dtype)


def layernorm(x, gamma, beta, eps=1e-5):
    *lead, D = x.shape
    M = int(np.prod(lead)) if lead else 1
    x2 = x.reshape(M, D)
    tile_m = _row_tile(M)
    out = pl.pallas_call(
        partial(_layernorm_kernel, eps=eps),
        out_shape=jax.ShapeDtypeStruct((M, D), x.dtype),
        grid=(M // tile_m,),
        in_specs=[
            pl.BlockSpec((tile_m, D), lambda i: (i, 0)),
            pl.BlockSpec((1, D), lambda i: (0, 0)),
            pl.BlockSpec((1, D), lambda i: (0, 0)),
        ],
        out_specs=pl.BlockSpec((tile_m, D), lambda i: (i, 0)),
        compiler_params=pltpu.CompilerParams(dimension_semantics=("parallel",)),
    )(x2, gamma.reshape(1, D), beta.reshape(1, D))
    return out.reshape(*lead, D)


# ---------------------------------------------------------------------------
# Kernel 4: per-(batch*head) fused attention
# ---------------------------------------------------------------------------
def _attention_kernel(q_ref, k_ref, v_ref, o_ref, *, scale):
    q = q_ref[0].astype(jnp.float32)          # (S, Dh)
    k = k_ref[0].astype(jnp.float32)
    v = v_ref[0].astype(jnp.float32)
    s = jax.lax.dot_general(q, k, (((1,), (1,)), ((), ())),
                            preferred_element_type=jnp.float32) * scale
    s = s - jnp.max(s, axis=-1, keepdims=True)
    p = jnp.exp(s)
    p = p / jnp.sum(p, axis=-1, keepdims=True)
    o_ref[0] = jnp.dot(p, v, preferred_element_type=jnp.float32).astype(o_ref.dtype)


def attention(q, k, v):
    """q, k, v: (B, H, S, Dh) -> (B, H, S, Dh)."""
    B, H, S, Dh = q.shape
    scale = float(Dh) ** -0.5
    qf, kf, vf = (t.reshape(B * H, S, Dh) for t in (q, k, v))
    out = pl.pallas_call(
        partial(_attention_kernel, scale=scale),
        out_shape=jax.ShapeDtypeStruct((B * H, S, Dh), q.dtype),
        grid=(B * H,),
        in_specs=[pl.BlockSpec((1, S, Dh), lambda i: (i, 0, 0)) for _ in range(3)],
        out_specs=pl.BlockSpec((1, S, Dh), lambda i: (i, 0, 0)),
        compiler_params=pltpu.CompilerParams(dimension_semantics=("parallel",)),
    )(qf, kf, vf)
    return out.reshape(B, H, S, Dh)


# ---------------------------------------------------------------------------
# Pure-JAX reference ops (for correctness checking)
# ---------------------------------------------------------------------------
def ref_patch_embed(x, weight, bias, patch_size):
    B, C, L = x.shape
    return jnp.einsum("bcpk,eck->bpe",
                      x.reshape(B, C, L // patch_size, patch_size), weight) + bias


def ref_linear(x, w, b, activation="none"):
    y = jnp.dot(x, w) + b
    return jax.nn.gelu(y, approximate=True) if activation == "gelu" else y


def ref_layernorm(x, gamma, beta, eps=1e-5):
    mu = jnp.mean(x, axis=-1, keepdims=True)
    var = jnp.mean(jnp.square(x - mu), axis=-1, keepdims=True)
    return (x - mu) * jax.lax.rsqrt(var + eps) * gamma + beta


def ref_attention(q, k, v):
    scale = float(q.shape[-1]) ** -0.5
    s = jnp.einsum("bhqd,bhkd->bhqk", q, k) * scale
    return jnp.einsum("bhqk,bhkd->bhqd", jax.nn.softmax(s, axis=-1), v)


PALLAS_OPS = dict(patch_embed=patch_embed_1d, linear=linear,
                  layernorm=layernorm, attention=attention)
REF_OPS = dict(patch_embed=ref_patch_embed, linear=ref_linear,
               layernorm=ref_layernorm, attention=ref_attention)


# ---------------------------------------------------------------------------
# Model plumbing (params, masking, blocks, full forward)
# ---------------------------------------------------------------------------
class MAEConfig(NamedTuple):
    signal_length: int = 32
    patch_size: int = 4
    in_chans: int = 1
    embed_dim: int = 32
    depth: int = 2
    num_heads: int = 4
    mlp_ratio: float = 4.0
    decoder_embed_dim: int = 32
    decoder_depth: int = 1
    decoder_num_heads: int = 4
    mask_ratio: float = 0.75


def get_1d_sincos_pos_embed(embed_dim, length):
    pos = np.arange(length, dtype=np.float64)
    omega = np.arange(embed_dim // 2, dtype=np.float64) / (embed_dim / 2.0)
    omega = 1.0 / 10000 ** omega
    out = np.einsum("m,d->md", pos, omega)
    return np.concatenate([np.sin(out), np.cos(out)], axis=1).astype(np.float32)


def _init_block(key, dim, mlp_ratio):
    hidden = int(dim * mlp_ratio)
    ks = jax.random.split(key, 4)
    lin = lambda k, fi, fo: (jax.random.normal(k, (fi, fo), jnp.float32) * 0.02,
                             jnp.zeros((fo,), jnp.float32))
    qkv_w, qkv_b = lin(ks[0], dim, 3 * dim)
    proj_w, proj_b = lin(ks[1], dim, dim)
    fc1_w, fc1_b = lin(ks[2], dim, hidden)
    fc2_w, fc2_b = lin(ks[3], hidden, dim)
    ones, zeros = jnp.ones((dim,), jnp.float32), jnp.zeros((dim,), jnp.float32)
    return dict(ln1_g=ones, ln1_b=zeros, qkv_w=qkv_w, qkv_b=qkv_b,
                proj_w=proj_w, proj_b=proj_b, ln2_g=ones, ln2_b=zeros,
                fc1_w=fc1_w, fc1_b=fc1_b, fc2_w=fc2_w, fc2_b=fc2_b)


def init_params(key, cfg):
    num_patches = cfg.signal_length // cfg.patch_size
    ks = list(jax.random.split(key, 8 + cfg.depth + cfg.decoder_depth))
    pop = ks.pop
    params = dict(
        patch_w=jax.random.normal(
            pop(), (cfg.embed_dim, cfg.in_chans, cfg.patch_size), jnp.float32) * 0.02,
        patch_b=jnp.zeros((cfg.embed_dim,), jnp.float32),
        pos_embed=jnp.asarray(get_1d_sincos_pos_embed(cfg.embed_dim, num_patches))[None],
        norm_g=jnp.ones((cfg.embed_dim,), jnp.float32),
        norm_b=jnp.zeros((cfg.embed_dim,), jnp.float32),
        dec_embed_w=jax.random.normal(
            pop(), (cfg.embed_dim, cfg.decoder_embed_dim), jnp.float32) * 0.02,
        dec_embed_b=jnp.zeros((cfg.decoder_embed_dim,), jnp.float32),
        mask_token=jax.random.normal(
            pop(), (1, 1, cfg.decoder_embed_dim), jnp.float32) * 0.02,
        dec_pos_embed=jnp.asarray(
            get_1d_sincos_pos_embed(cfg.decoder_embed_dim, num_patches))[None],
        dec_norm_g=jnp.ones((cfg.decoder_embed_dim,), jnp.float32),
        dec_norm_b=jnp.zeros((cfg.decoder_embed_dim,), jnp.float32),
        dec_pred_w=jax.random.normal(
            pop(), (cfg.decoder_embed_dim, cfg.patch_size * cfg.in_chans),
            jnp.float32) * 0.02,
        dec_pred_b=jnp.zeros((cfg.patch_size * cfg.in_chans,), jnp.float32),
    )
    params["enc_blocks"] = tuple(
        _init_block(pop(), cfg.embed_dim, cfg.mlp_ratio) for _ in range(cfg.depth))
    params["dec_blocks"] = tuple(
        _init_block(pop(), cfg.decoder_embed_dim, cfg.mlp_ratio)
        for _ in range(cfg.decoder_depth))
    return params


def transformer_block(x, p, num_heads, ops):
    B, S, D = x.shape
    h = ops["layernorm"](x, p["ln1_g"], p["ln1_b"])
    qkv = ops["linear"](h, p["qkv_w"], p["qkv_b"])
    qkv = qkv.reshape(B, S, 3, num_heads, D // num_heads)
    q = jnp.transpose(qkv[:, :, 0], (0, 2, 1, 3))
    k = jnp.transpose(qkv[:, :, 1], (0, 2, 1, 3))
    v = jnp.transpose(qkv[:, :, 2], (0, 2, 1, 3))
    a = ops["attention"](q, k, v)
    a = jnp.transpose(a, (0, 2, 1, 3)).reshape(B, S, D)
    x = x + ops["linear"](a, p["proj_w"], p["proj_b"])
    h = ops["layernorm"](x, p["ln2_g"], p["ln2_b"])
    h = ops["linear"](h, p["fc1_w"], p["fc1_b"], activation="gelu")
    return x + ops["linear"](h, p["fc2_w"], p["fc2_b"])


def random_masking(x, noise, len_keep):
    # torch.rand + argsort masking; sort/gather stay in plain JAX.
    N, L, D = x.shape
    ids_shuffle = jnp.argsort(noise, axis=1)
    ids_restore = jnp.argsort(ids_shuffle, axis=1)
    ids_keep = ids_shuffle[:, :len_keep]
    x_masked = jnp.take_along_axis(
        x, jnp.broadcast_to(ids_keep[:, :, None], (N, len_keep, D)), axis=1)
    mask = jnp.ones((N, L), x.dtype).at[:, :len_keep].set(0.0)
    mask = jnp.take_along_axis(mask, ids_restore, axis=1)
    return x_masked, mask, ids_restore


def patchify(signals, p):
    N, C, L = signals.shape
    x = signals.reshape(N, C, L // p, p)
    x = jnp.transpose(x, (0, 2, 3, 1))               # nclp -> nlpc
    return x.reshape(N, L // p, p * C)


def mae_forward_impl(params, signals, rng, cfg, ops):
    num_patches = cfg.signal_length // cfg.patch_size
    len_keep = int(num_patches * (1.0 - cfg.mask_ratio))

    # ----- encoder -----
    x = ops["patch_embed"](signals, params["patch_w"], params["patch_b"],
                           patch_size=cfg.patch_size)
    x = x + params["pos_embed"]
    noise = jax.random.uniform(rng, (x.shape[0], num_patches))
    x, mask, ids_restore = random_masking(x, noise, len_keep)
    for blk in params["enc_blocks"]:
        x = transformer_block(x, blk, cfg.num_heads, ops)
    x = ops["layernorm"](x, params["norm_g"], params["norm_b"])

    # ----- decoder -----
    x = ops["linear"](x, params["dec_embed_w"], params["dec_embed_b"])
    N, n_keep, Ed = x.shape
    n_mask = ids_restore.shape[1] + 1 - n_keep        # matches reference code exactly
    mask_tokens = jnp.broadcast_to(params["mask_token"], (N, n_mask, Ed))
    x_ = jnp.concatenate([x, mask_tokens], axis=1)
    x = jnp.take_along_axis(
        x_, jnp.broadcast_to(ids_restore[:, :, None], (N, num_patches, Ed)), axis=1)
    x = x + params["dec_pos_embed"]
    for blk in params["dec_blocks"]:
        x = transformer_block(x, blk, cfg.decoder_num_heads, ops)
    x = ops["layernorm"](x, params["dec_norm_g"], params["dec_norm_b"])
    pred = ops["linear"](x, params["dec_pred_w"], params["dec_pred_b"])

    # ----- loss ----- (masked-mean scalar reduction kept in plain JAX)
    target = patchify(signals, cfg.patch_size)
    loss = jnp.mean((pred - target) ** 2, axis=-1)
    loss = jnp.sum(loss * mask) / jnp.sum(mask)
    return loss, pred, mask


@partial(jax.jit, static_argnames=("cfg",))
def mae_forward(params, signals, rng, cfg):
    return mae_forward_impl(params, signals, rng, cfg, PALLAS_OPS)


@partial(jax.jit, static_argnames=("cfg",))
def mae_forward_ref(params, signals, rng, cfg):
    return mae_forward_impl(params, signals, rng, cfg, REF_OPS)


if __name__ == "__main__":
    cfg = MAEConfig()
    num_patches = cfg.signal_length // cfg.patch_size

    root = jax.random.PRNGKey(0)
    pkey, xkey, mkey = jax.random.split(root, 3)
    params = init_params(pkey, cfg)
    signals = jax.random.normal(xkey, (2, cfg.in_chans, cfg.signal_length), jnp.float32)

    loss, pred, mask = jax.block_until_ready(
        mae_forward(params, signals, mkey, cfg=cfg))
    loss_r, pred_r, mask_r = jax.block_until_ready(
        mae_forward_ref(params, signals, mkey, cfg=cfg))

    assert pred.shape == (2, num_patches, cfg.patch_size * cfg.in_chans)
    assert mask.shape == (2, num_patches)
    assert bool(jnp.isfinite(loss))
    assert jnp.allclose(mask, mask_r)
    assert jnp.allclose(pred, pred_r, atol=2e-4, rtol=2e-4), \
        float(jnp.max(jnp.abs(pred - pred_r)))
    assert jnp.allclose(loss, loss_r, atol=2e-4, rtol=2e-4)

    print("KERNEL_OK")
</pallas_src>

<mosaic_0001>
module attributes {stable_mosaic.version = 11 : i64} {
  func.func @_patch_embed_kernel(%arg0: i32, %arg1: i32, %arg2: memref<1x1x8x4xf32, #tpu.memory_space<vmem>>, %arg3: memref<1x4x128xf32, #tpu.memory_space<vmem>>, %arg4: memref<1x128xf32, #tpu.memory_space<vmem>>, %arg5: memref<1x8x128xf32, #tpu.memory_space<vmem>>) attributes {dimension_semantics = [#tpu.dimension_semantics<parallel>, #tpu.dimension_semantics<parallel>], iteration_bounds = array<i64: 2, 1>, scalar_prefetch = 0 : i64, scratch_operands = 0 : i64, tpu.core_type = #tpu.core_type<tc>, window_params = [{transform_indices = @transform_0, window_bounds = array<i64: 1, 1, 8, 4>}, {pipeline_mode = #tpu.pipeline_mode<synchronous>, transform_indices = @transform_1, window_bounds = array<i64: 1, 4, 128>}, {pipeline_mode = #tpu.pipeline_mode<synchronous>, transform_indices = @transform_2, window_bounds = array<i64: 1, 128>}, {transform_indices = @transform_3, window_bounds = array<i64: 1, 8, 128>}]} {
    %c0 = arith.constant 0 : index
    %c0_0 = arith.constant 0 : index
    %c0_1 = arith.constant 0 : index
    %c0_2 = arith.constant 0 : index
    %0 = vector.load %arg2[%c0, %c0_0, %c0_1, %c0_2] : memref<1x1x8x4xf32, #tpu.memory_space<vmem>>, vector<1x1x8x4xf32>
    %1 = vector.shape_cast %0 : vector<1x1x8x4xf32> to vector<8x4xf32>
    %c0_3 = arith.constant 0 : index
    %c0_4 = arith.constant 0 : index
    %c0_5 = arith.constant 0 : index
    %2 = vector.load %arg3[%c0_3, %c0_4, %c0_5] : memref<1x4x128xf32, #tpu.memory_space<vmem>>, vector<1x4x128xf32>
    %3 = vector.shape_cast %2 : vector<1x4x128xf32> to vector<4x128xf32>
    %cst = arith.constant dense<0.000000e+00> : vector<8x128xf32>
    %4 = tpu.matmul %1, %3, %cst {dimension_numbers = #tpu.dot_dimension_numbers<[1], [0], [0], [1], [0, 0, 1, 1], [], []>} : vector<8x4xf32>, vector<4x128xf32>, vector<8x128xf32> -> vector<8x128xf32>
    %c0_6 = arith.constant 0 : index
    %c0_7 = arith.constant 0 : index
    %5 = vector.load %arg4[%c0_6, %c0_7] : memref<1x128xf32, #tpu.memory_space<vmem>>, vector<1x128xf32>
    %6 = vector.broadcast %5 : vector<1x128xf32> to vector<8x128xf32>
    %7 = arith.addf %4, %6 : vector<8x128xf32>
    %c0_8 = arith.constant 0 : index
    %c0_9 = arith.constant 0 : index
    %c0_10 = arith.constant 0 : index
    %8 = vector.load %arg5[%c0_8, %c0_9, %c0_10] : memref<1x8x128xf32, #tpu.memory_space<vmem>>, vector<1x8x128xf32>
    %9 = vector.shape_cast %8 : vector<1x8x128xf32> to vector<8x128xf32>
    %10 = vector.shape_cast %7 : vector<8x128xf32> to vector<1x8x128xf32>
    tpu.vector_store %arg5[%c0_8, %c0_9, %c0_10], %10 {strides = array<i32>} : memref<1x8x128xf32, #tpu.memory_space<vmem>>, vector<1x8x128xf32>,
    return
  }
  func.func @transform_0(%arg0: i32, %arg1: i32) -> (i32, i32, i32, i32) {
    %c0_i32 = arith.constant 0 : i32
    %c0_i32_0 = arith.constant 0 : i32
    %c0_i32_1 = arith.constant 0 : i32
    return %arg0, %c0_i32, %arg1, %c0_i32_0 : i32, i32, i32, i32
  }
  func.func @transform_1(%arg0: i32, %arg1: i32) -> (i32, i32, i32) {
    %c0_i32 = arith.constant 0 : i32
    %c0_i32_0 = arith.constant 0 : i32
    %c0_i32_1 = arith.constant 0 : i32
    %c0_i32_2 = arith.constant 0 : i32
    return %c0_i32, %c0_i32_0, %c0_i32_1 : i32, i32, i32
  }
  func.func @transform_2(%arg0: i32, %arg1: i32) -> (i32, i32) {
    %c0_i32 = arith.constant 0 : i32
    %c0_i32_0 = arith.constant 0 : i32
    %c0_i32_1 = arith.constant 0 : i32
    return %c0_i32, %c0_i32_0 : i32, i32
  }
  func.func @transform_3(%arg0: i32, %arg1: i32) -> (i32, i32, i32) {
    %c0_i32 = arith.constant 0 : i32
    %c0_i32_0 = arith.constant 0 : i32
    return %arg0, %arg1, %c0_i32 : i32, i32, i32
  }
}

</mosaic_0001>

<llo_original>
// kernel: patch_embed_1d.1
$region0: #{patch_embed_1d.1}
  #allocation0 [shape = 'u32[]', space=smem, size = 0x4, offset = 0x4, fixed_abs, tag = 'smem constant byte address 0x4 - core index']
  #allocation1 [shape = 'u32[144,128]{1,0:T(1,128)}', space=vmem, size = 0x12000, scoped, tag = 'internal scratch']
  %s0 = inlined_call_operand.vmem [shape: f32[2,1,8,4], index: 0, kind: input, shape index: {}]
  %s1 = inlined_call_operand.vmem [shape: f32[1,4,128], index: 1, kind: input, shape index: {}]
  %s2 = inlined_call_operand.vmem [shape: f32[1,128], index: 2, kind: input, shape index: {}]
  %s3 = inlined_call_operand.hbm [shape: f32[2,8,128], index: 3, kind: output, shape index: {}]
  %s4 = sld [smem:[#allocation0]]
  $region45: #{patch_embed_1d.1} parent=0
    _
  %s6 = ssub.s32 1, %s4
  %s7 = scalar_select 0, %s6, %s4
  $region1: #{patch_embed_1d.1} parent=0
    #allocation2 [shape = 'u8[8192]{0}', space=vmem, size = 0x2000, scoped, tag = 'output window, operand 0']
    #allocation3 [shape = 's32[2]{0}', space=sflag, size = 0x8, scoped, tag = 'scoped memory for patch_embed_1d.1']
    %8 = vsyncpa [#allocation3], 0
    %s9 = scalar_lea.sflag [#allocation3], 1
    %10 = vsyncpa %s9, 0
    loop: start=0, step=1, limit=4
    $region2: #{patch_embed_1d.1} parent=1 // loop_pre_header
      _
    $region3: #{patch_embed_1d.1} parent=1 // loop_header
      %s12 = sphi 0, %s16
      %p13 = scmp.ge.s32.totalorder %s12, 4
      %s19 = sphi 0, %s31
      %s20 = sphi 0, %s27
      %s21 = sphi 0, %s19
      %s22 = sphi 0, %s20
      %s23 = sphi 0, %s21
      %s24 = sphi 0, %s22
      %s36 = sphi 0, %s38
      %s39 = sphi 0, %s36
      %s40 = sphi 0, %s39
      %s56 = sphi 0, %s40
      %s60 = sphi 0, %s60
      %s62 = sphi 0, %s60
      %s63 = sphi 0, %s62
      %s77 = sphi 0, %s63
      %s81 = sphi 0, %s81
      %s83 = sphi 0, %s81
      %s84 = sphi 0, %s83
      %s98 = sphi 0, %s84
      %s106 = sphi 0, %s108
      %s109 = sphi 0, %s106
      %s110 = sphi 0, %s109
      %s126 = sphi 0, %s110
    $region4: #{patch_embed_1d.1} parent=1 // loop_header_branch
      %15 = sbr.rel (%p13) target = $region8
    $region5: #{patch_embed_1d.1} parent=1 // loop_body
      %s17 = ssub.s32 %s12, 1
      %s18 = ssub.s32 %s12, 2
      %s25 = sadd.s32 1, %s20
      %p26 = scmp.ge.s32.totalorder %s25, 1
      %s27 = scalar_select %p26, 0, %s25
      %s28 = sadd.s32 1, %s19
      %s29 = scalar_select %p26, %s28, %s19
      %p30 = scmp.ge.s32.totalorder %s29, 2
      %s31 = scalar_select %p30, 0, %s29
      %s32 = ssub.s32 %s19, %s31
      %s33 = ssub.s32 %s20, %s27
      %s34 = sor.u32 %s32, %s33
      %p35 = scmp.eq.s32.totalorder %s34, 0
      %s37 = sadd.s32 %s36, 1
      %s38 = scalar_select %p35, %s36, %s37
      %p41 = pneg %p35
      %p42 = scmp.eq.s32.totalorder %s12, 1
      %p43 = por %p41, %p42
      %p44 = scmp.ne.s32.totalorder %s36, %s39
      %p45 = scmp.eq.s32.totalorder %s12, 0
      %p46 = por %p44, %p45
      %p47 = scmp.ne.s32.totalorder %s36, %s39
      %p48 = scmp.eq.s32.totalorder %s17, 1
      %p49 = por %p47, %p48
      %p50 = scmp.ne.s32.totalorder %s39, %s40
      %p51 = scmp.eq.s32.totalorder %s17, 0
      %p52 = por %p50, %p51
      %p53 = scmp.ne.s32.totalorder %s39, %s40
      %p54 = scmp.eq.s32.totalorder %s18, 1
      %p55 = por %p53, %p54
      %p57 = scmp.ne.s32.totalorder %s40, %s56
      %p58 = scmp.eq.s32.totalorder %s18, 0
      %p59 = por %p57, %p58
      %s61 = sadd.s32 %s60, 1
      %p64 = scmp.eq.s32.totalorder %s12, 1
      %p65 = scmp.ne.s32.totalorder %s60, %s62
      %p66 = scmp.eq.s32.totalorder %s12, 0
      %p67 = por %p65, %p66
      %p68 = scmp.ne.s32.totalorder %s60, %s62
      %p69 = scmp.eq.s32.totalorder %s17, 1
      %p70 = por %p68, %p69
      %p71 = scmp.ne.s32.totalorder %s62, %s63
      %p72 = scmp.eq.s32.totalorder %s17, 0
      %p73 = por %p71, %p72
      %p74 = scmp.ne.s32.totalorder %s62, %s63
      %p75 = scmp.eq.s32.totalorder %s18, 1
      %p76 = por %p74, %p75
      %p78 = scmp.ne.s32.totalorder %s63, %s77
      %p79 = scmp.eq.s32.totalorder %s18, 0
      %p80 = por %p78, %p79
      %s82 = sadd.s32 %s81, 1
      %p85 = scmp.eq.s32.totalorder %s12, 1
      %p86 = scmp.ne.s32.totalorder %s81, %s83
      %p87 = scmp.eq.s32.totalorder %s12, 0
      %p88 = por %p86, %p87
      %p89 = scmp.ne.s32.totalorder %s81, %s83
      %p90 = scmp.eq.s32.totalorder %s17, 1
      %p91 = por %p89, %p90
      %p92 = scmp.ne.s32.totalorder %s83, %s84
      %p93 = scmp.eq.s32.totalorder %s17, 0
      %p94 = por %p92, %p93
      %p95 = scmp.ne.s32.totalorder %s83, %s84
      %p96 = scmp.eq.s32.totalorder %s18, 1
      %p97 = por %p95, %p96
      %p99 = scmp.ne.s32.totalorder %s84, %s98
      %p100 = scmp.eq.s32.totalorder %s18, 0
      %p101 = por %p99, %p100
      %s102 = ssub.s32 %s19, %s31
      %s103 = ssub.s32 %s20, %s27
      %s104 = sor.u32 %s102, %s103
      %p105 = scmp.eq.s32.totalorder %s104, 0
      %s107 = sadd.s32 %s106, 1
      %s108 = scalar_select %p105, %s106, %s107
      %p111 = pneg %p105
      %p112 = scmp.eq.s32.totalorder %s12, 1
      %p113 = por %p111, %p112
      %p114 = scmp.ne.s32.totalorder %s106, %s109
      %p115 = scmp.eq.s32.totalorder %s12, 0
      %p116 = por %p114, %p115
      %p117 = scmp.ne.s32.totalorder %s106, %s109
      %p118 = scmp.eq.s32.totalorder %s17, 1
      %p119 = por %p117, %p118
      %p120 = scmp.ne.s32.totalorder %s109, %s110
      %p121 = scmp.eq.s32.totalorder %s17, 0
      %p122 = por %p120, %p121
      %p123 = scmp.ne.s32.totalorder %s109, %s110
      %p124 = scmp.eq.s32.totalorder %s18, 1
      %p125 = por %p123, %p124
      %p127 = scmp.ne.s32.totalorder %s110, %s126
      %p128 = scmp.eq.s32.totalorder %s18, 0
      %p129 = por %p127, %p128
      %p130 = scmp.le.s32.totalorder 1, %s12
      %p131 = scmp.lt.s32.totalorder %s12, 3
      %p132 = pnand %p130, %p131
      %p133 = pneg %p132
      // Predicated region
      $region9: #{patch_embed_1d.1} parent=5 // pred_check
        _
      $region10: #{patch_embed_1d.1} parent=5 // pred_check_branch
        %135 = sbr.rel (%p132) target = $region12
      $region11: #{patch_embed_1d.1} parent=5 // pred_region
        %s136 = ssub.s32 %s12, 1
        // Predicated region
        $region13: #{patch_embed_1d.1} parent=11 // pred_check
          %p137 = pneg %p73
        $region14: #{patch_embed_1d.1} parent=11 // pred_check_branch
          %139 = sbr.rel (%p137) target = $region16
        $region15: #{patch_embed_1d.1} parent=11 // pred_region
          _
        $region16: #{patch_embed_1d.1} parent=11 // pred_fallthru
          _
        // Predicated region
        $region17: #{patch_embed_1d.1} parent=11 // pred_check
          %p140 = pneg %p94
        $region18: #{patch_embed_1d.1} parent=11 // pred_check_branch
          %142 = sbr.rel (%p140) target = $region20
        $region19: #{patch_embed_1d.1} parent=11 // pred_region
          _
        $region20: #{patch_embed_1d.1} parent=11 // pred_fallthru
          _
      $region12: #{patch_embed_1d.1} parent=5 // pred_fallthru
        _
      %p143 = scmp.lt.s32.totalorder %s12, 2
      // Predicated region
      $region21: #{patch_embed_1d.1} parent=5 // pred_check
        %p144 = pneg %p143
      $region22: #{patch_embed_1d.1} parent=5 // pred_check_branch
        %146 = sbr.rel (%p144) target = $region24
      $region23: #{patch_embed_1d.1} parent=5 // pred_region
        // Predicated region
        $region25: #{patch_embed_1d.1} parent=23 // pred_check
          %p147 = pneg %p46
        $region26: #{patch_embed_1d.1} parent=23 // pred_check_branch
          %149 = sbr.rel (%p147) target = $region28
        $region27: #{patch_embed_1d.1} parent=23 // pred_region
          %p150 = scmp.lt.s32.totalorder %s19, 1
          %s151 = scalar_select %p150, %s19, 1
          %p152 = scmp.lt.s32.totalorder %s20, 0
          %s153 = scalar_select %p152, %s20, 0
          %s154 = sadd.s32 %s153, %s151
          %s155 = smul.addr %s154, 8
          %s156 = scalar_lea.vmem %s0, %s155
        $region28: #{patch_embed_1d.1} parent=23 // pred_fallthru
          _
      $region24: #{patch_embed_1d.1} parent=5 // pred_fallthru
        _
      %p157 = scmp.le.s32.totalorder 1, %s12
      %p158 = scmp.lt.s32.totalorder %s12, 3
      %p159 = pnand %p157, %p158
      %p160 = pneg %p159
      // Predicated region
      $region29: #{patch_embed_1d.1} parent=5 // pred_check
        _
      $region30: #{patch_embed_1d.1} parent=5 // pred_check_branch
        %162 = sbr.rel (%p159) target = $region32
      $region31: #{patch_embed_1d.1} parent=5 // pred_region
        %s163 = ssub.s32 %s12, 1
        %p164 = scmp.lt.s32.totalorder %s21, 1
        %s165 = scalar_select %p164, %s21, 1
        %p166 = scmp.lt.s32.totalorder %s22, 0
        %s167 = scalar_select %p166, %s22, 0
        %s168 = sadd.s32 %s167, %s165
        %s169 = smul.addr %s168, 8
        %s170 = scalar_lea.vmem %s0, %s169
        %p171 = pneg %p52
        %p172 = pneg %p49
        %p173 = pneg %p73
        %p174 = pneg %p70
        %p175 = pneg %p94
        %p176 = pneg %p91
        %p177 = pneg %p122
        %p178 = pneg %p119
        %s179 = sand.u32 %s109, 1
        %s180 = scalar_lea.sflag [#allocation3], %s179
        %s181 = sand.u32 %s109, 1
        %s182 = smul.addr %s181, 8
        %s183 = scalar_lea.vmem [#allocation2], %s182
        %p184 = scmp.lt.s32.totalorder %s21, 1
        %s185 = scalar_select %p184, %s21, 1
        %p186 = scmp.lt.s32.totalorder %s22, 0
        %s187 = scalar_select %p186, %s22, 0
        %s188 = sadd.s32 %s187, %s185
        %s189 = smul.addr %s188, 8
        %s190 = scalar_lea.vmem %s0, %s189
        %v191 = vld [vmem:[%s190] sm:$0xff]
        %v192 = vld [vmem:[%s1] sm:$0xf]
        %v193 = vld [vmem:[%s2] sm:$0x1]
        %v195 = vlaneseq
        %v196 = vshrl.u32 %v195, 7
        %v197 = vsub.s32 0, %v196
        %v198 = vrot.slane %v193, %v197
        %vm200 = vcmask 31744
        %v202 = vsel %vm200, %v191, 0
        %vm204 = vcmask 1043456
        %v206 = vsel %vm204, %v192, 0
        %208 = vmatprep.subr.mxu0 0.0
        %209 = vmatpush1.msra.mxu0 %v206
        %210 = vmatprep.subr.mxu0 0.0
        %211 = vmatpush1.msra.mxu0 0.0
        %212 = vmatprep.subr.mxu0 0.0
        %213 = vmatpush1.msra.mxu0 0.0
        %214 = vmatprep.subr.mxu0 0.0
        %215 = vmatpush1.msra.mxu0 0.0
        %216 = vmatprep.subr.mxu0 0.0
        %217 = vmatpush1.msra.mxu0 0.0
        %218 = vmatprep.subr.mxu0 0.0
        %219 = vmatpush1.msra.mxu0 0.0
        %220 = vmatprep.subr.mxu0 0.0
        %221 = vmatpush1.msra.mxu0 0.0
        %222 = vmatprep.subr.mxu0 0.0
        %223 = vmatpush1.msra.mxu0 0.0
        %224 = vmatprep.subr.mxu0 0.0
        %225 = vmatpush1.msra.mxu0 0.0
        %226 = vmatprep.subr.mxu0 0.0
        %227 = vmatpush1.msra.mxu0 0.0
        %228 = vmatprep.subr.mxu0 0.0
        %229 = vmatpush1.msra.mxu0 0.0
        %230 = vmatprep.subr.mxu0 0.0
        %231 = vmatpush1.msra.mxu0 0.0
        %232 = vmatprep.subr.mxu0 0.0
        %233 = vmatpush1.msra.mxu0 0.0
        %234 = vmatprep.subr.mxu0 0.0
        %235 = vmatpush1.msra.mxu0 0.0
        %236 = vmatprep.subr.mxu0 0.0
        %237 = vmatpush1.msra.mxu0 0.0
        %238 = vmatprep.subr.mxu0 0.0
        %239 = vmatpush1.msra.mxu0 0.0
        %240 = vmatprep.subr.mxu0 0.0
        %241 = vmatpush1.msra.mxu0 0.0
        %242 = vmatprep.subr.mxu0 0.0
        %243 = vmatpush1.msra.mxu0 0.0
        %244 = vmatprep.subr.mxu0 0.0
        %245 = vmatpush1.msra.mxu0 0.0
        %246 = vmatprep.subr.mxu0 0.0
        %247 = vmatpush1.msra.mxu0 0.0
        %248 = vmatprep.subr.mxu0 0.0
        %249 = vmatpush1.msra.mxu0 0.0
        %250 = vmatprep.subr.mxu0 0.0
        %251 = vmatpush1.msra.mxu0 0.0
        %252 = vmatprep.subr.mxu0 0.0
        %253 = vmatpush1.msra.mxu0 0.0
        %254 = vmatprep.subr.mxu0 0.0
        %255 = vmatpush1.msra.mxu0 0.0
        %256 = vmatprep.subr.mxu0 0.0
        %257 = vmatpush1.msra.mxu0 0.0
        %258 = vmatprep.subr.mxu0 0.0
        %259 = vmatpush1.msra.mxu0 0.0
        %260 = vmatprep.subr.mxu0 0.0
        %261 = vmatpush1.msra.mxu0 0.0
        %262 = vmatprep.subr.mxu0 0.0
        %263 = vmatpush1.msra.mxu0 0.0
        %264 = vmatprep.subr.mxu0 0.0
        %265 = vmatpush1.msra.mxu0 0.0
        %266 = vmatprep.subr.mxu0 0.0
        %267 = vmatpush1.msra.mxu0 0.0
        %268 = vmatprep.subr.mxu0 0.0
        %269 = vmatpush1.msra.mxu0 0.0
        %270 = vmatprep.subr.mxu0 0.0
        %271 = vmatpush1.msra.mxu0 0.0
        %272 = vmatprep.mubr.f32.mxu0 0.0
        %273 = vmatmul.mubr.f32.gmra.mrb[0].mxu0 %v202
        %v274 = vpop.f32.mrb[0].mxu0
        %v275 = vadd.f32 %v198, %v274
        %v276 = vpop.f32.mrb[0].mxu0
        %277 = vdwg.mxu0
        %278 = vst [vmem:[%s183] sm:$0xff] %v275
        %s279 = sand.u32 %s109, 1
        %s280 = scalar_lea.sflag [#allocation3], %s279
        %s281 = sand.u32 %s109, 1
        %s282 = smul.addr %s281, 8
        %s283 = scalar_lea.vmem [#allocation2], %s282
        // Predicated region
        $region33: #{patch_embed_1d.1} parent=31 // pred_check
          %p284 = pneg %p119
        $region34: #{patch_embed_1d.1} parent=31 // pred_check_branch
          %286 = sbr.rel (%p284) target = $region36
        $region35: #{patch_embed_1d.1} parent=31 // pred_region
          %s288 = ssub.s32 128, 128
          %289 = vsyncadd %s280, %s288
          %s290 = sadd.s32 %s22, %s21
          %s291 = smul.addr %s290, 128
          %s292 = scalar_lea.hbm %s3, %s291
          %s294 = sshll.u32 %s283, 4
          %s295 = int_to_ptr.vmem [resolvable:$true] %s294
          %297 = dma.vmem_to_hbm [thread:$0]  %s295, 128, %s292, %s280
        $region36: #{patch_embed_1d.1} parent=31 // pred_fallthru
          _
      $region32: #{patch_embed_1d.1} parent=5 // pred_fallthru
        _
      %p298 = scmp.le.s32.totalorder 2, %s12
      // Predicated region
      $region37: #{patch_embed_1d.1} parent=5 // pred_check
        %p299 = pneg %p298
      $region38: #{patch_embed_1d.1} parent=5 // pred_check_branch
        %301 = sbr.rel (%p299) target = $region40
      $region39: #{patch_embed_1d.1} parent=5 // pred_region
        %s302 = ssub.s32 %s12, 2
        // Predicated region
        $region41: #{patch_embed_1d.1} parent=39 // pred_check
          %p303 = pneg %p125
        $region42: #{patch_embed_1d.1} parent=39 // pred_check_branch
          %305 = sbr.rel (%p303) target = $region44
        $region43: #{patch_embed_1d.1} parent=39 // pred_region
          %s306 = sand.u32 %s110, 1
          %s307 = scalar_lea.sflag [#allocation3], %s306
          %s308 = sand.u32 %s110, 1
          %s309 = smul.addr %s308, 8
          %s310 = scalar_lea.vmem [#allocation2], %s309
          %311 = dma.done %s307, 128
        $region44: #{patch_embed_1d.1} parent=39 // pred_fallthru
          _
      $region40: #{patch_embed_1d.1} parent=5 // pred_fallthru
        _
    $region6: #{patch_embed_1d.1} parent=1 // loop_footer
      %s16 = sadd.s32 1, %s12
    $region7: #{patch_embed_1d.1} parent=1 // loop_footer_branch
      %11 = sbr.rel target = $region3
    $region8: #{patch_embed_1d.1} parent=1 // loop_exit
      _
    %312 = vsyncpa [#allocation3], 1
    %s313 = scalar_lea.sflag [#allocation3], 1
    %314 = vsyncpa %s313, 1

</llo_original>
